<compile_context>
chip_gen: v7x
topology: tpu7x:2x2x1
jax: 0.10.0
libtpu: 0.0.40
codegen_flags: <defaults>
</compile_context>

<pallas_src>
import math

import jax
import jax.numpy as jnp
from jax.experimental import pallas as pl
from jax.experimental.pallas import tpu as pltpu

# DiffBinarizer constants (match the PyTorch module defaults).
_K = 50.0
_T = 0.5
# sigmoid(k*(x - t)) == 0.5 * (1 + tanh(0.5*k*x - 0.5*k*t))  -- one EUP op.
_A = 0.5 * _K          # 25.0
_B = 0.5 * _K * _T     # 12.5

_LANES_MAX = 2048            # lane-dense slab width (multiple of 128)
_TARGET_BLOCK_BYTES = 4 << 20  # ~4 MiB per block (amortizes per-step overhead)


def _round_up(x: int, m: int) -> int:
    return ((x + m - 1) // m) * m


def _diff_binarizer_kernel(prob_ref, out_ref):
    # f32 compute regardless of I/O dtype; one transcendental (tanh -> EUP),
    # the remaining mul/add stay on the VPU.
    x = prob_ref[...].astype(jnp.float32)
    y = 0.5 * (1.0 + jnp.tanh(_A * x - _B))
    out_ref[...] = y.astype(out_ref.dtype)


def _choose_lanes_fast(total: int) -> int:
    # Largest lane width (multiple of 128) that divides total -> no padding.
    for lanes in (2048, 1024, 512, 256, 128):
        if total % lanes == 0:
            return lanes
    return 128  # unreachable when total % 128 == 0


def _choose_block_rows(rows: int, lanes: int, itemsize: int) -> int:
    if rows <= 8:
        # Single block equal to the full row extent (valid even if rows % 8 != 0
        # because block dims that equal the array dims are allowed).
        return rows
    # ~4 MiB blocks; keep the row count a multiple of 8.
    target = max(8, (_TARGET_BLOCK_BYTES // (lanes * itemsize)) // 8 * 8)
    # Ensure >= 2 grid steps so work shards across v7x's two TensorCores.
    half = _round_up(pl.cdiv(rows, 2), 8)
    return min(target, half)


def _run_slab(slab: jax.Array, block_rows: int, donate_input: bool) -> jax.Array:
    rows, lanes = slab.shape
    kwargs = {}
    if donate_input:
        # Only pays off when the caller truly donates the input buffer;
        # otherwise XLA inserts a protective copy (extra HBM traffic).
        kwargs["input_output_aliases"] = {0: 0}
    return pl.pallas_call(
        _diff_binarizer_kernel,
        out_shape=jax.ShapeDtypeStruct((rows, lanes), slab.dtype),
        grid_spec=pltpu.PrefetchScalarGridSpec(
            num_scalar_prefetch=0,
            grid=(pl.cdiv(rows, block_rows),),
            in_specs=[pl.BlockSpec((block_rows, lanes), lambda i: (i, 0))],
            out_specs=pl.BlockSpec((block_rows, lanes), lambda i: (i, 0)),
        ),
        compiler_params=pltpu.CompilerParams(
            dimension_semantics=("parallel",),
            # Above the v5e scoped default (16 MiB); 4 MiB blocks double-buffered
            # for in+out = 16 MiB live. Safe on v6e (128 MiB) and v7x (64 MiB).
            vmem_limit_bytes=32 << 20,
        ),
        **kwargs,
    )(slab)


def diff_binarizer(prob: jax.Array, *, donate_input: bool = False) -> jax.Array:
    """Differentiable binarization: 1 / (1 + exp(-k * (prob - t))), elementwise."""
    orig_shape = prob.shape
    total = math.prod(orig_shape)
    itemsize = jnp.dtype(prob.dtype).itemsize

    if total % 128 == 0:
        # Fast path: zero-copy reshape, no padding, no output slice.
        lanes = _choose_lanes_fast(total)
        rows = total // lanes
        slab = prob.reshape(rows, lanes)
        block_rows = _choose_block_rows(rows, lanes, itemsize)
        out = _run_slab(slab, block_rows, donate_input)
        return out.reshape(orig_shape)

    # Fallback (rare): pad flat data up to a (rows, lanes) slab, slice the tail.
    lanes = _LANES_MAX if total >= _LANES_MAX else _round_up(total, 128)
    rows = pl.cdiv(total, lanes)
    padded = rows * lanes
    flat = jnp.pad(prob.reshape(-1), (0, padded - total))
    slab = flat.reshape(rows, lanes)
    block_rows = _choose_block_rows(rows, lanes, itemsize)
    out = _run_slab(slab, block_rows, donate_input)
    return out.reshape(-1)[:total].reshape(orig_shape)


def _reference(prob):
    # Mirrors the PyTorch forward exactly: 1 / (1 + exp(-k * (x - t))).
    x = prob.astype(jnp.float32)
    return (1.0 / (1.0 + jnp.exp(-_K * (x - _T)))).astype(prob.dtype)


if __name__ == "__main__":
    key = jax.random.PRNGKey(0)

    # 1) Small NCHW probability map (fast path: total = 2048, single block).
    x1 = jax.random.uniform(key, (2, 4, 16, 16), dtype=jnp.float32)
    y1 = jax.block_until_ready(diff_binarizer(x1))
    assert y1.shape == x1.shape
    assert jnp.allclose(y1, _reference(x1), atol=1e-5, rtol=1e-5)

    # 2) Odd shape (total not a multiple of 128) -> padded fallback path.
    x2 = jax.random.uniform(jax.random.PRNGKey(1), (3, 5, 17, 19), dtype=jnp.float32)
    y2 = jax.block_until_ready(diff_binarizer(x2))
    assert y2.shape == x2.shape
    assert jnp.allclose(y2, _reference(x2), atol=1e-5, rtol=1e-5)

    # 3) Larger map -> fast path with a multi-step grid (splits across TCs on v7x).
    x3 = jax.random.uniform(jax.random.PRNGKey(2), (2, 8, 64, 64), dtype=jnp.float32)
    y3 = jax.block_until_ready(diff_binarizer(x3))
    assert y3.shape == x3.shape
    assert jnp.allclose(y3, _reference(x3), atol=1e-5, rtol=1e-5)

    print("KERNEL_OK")
</pallas_src>

<mosaic_0001>
module attributes {stable_mosaic.version = 11 : i64} {
  func.func @_diff_binarizer_kernel(%arg0: i32, %arg1: memref<1x2048xf32, #tpu.memory_space<vmem>>, %arg2: memref<1x2048xf32, #tpu.memory_space<vmem>>) attributes {dimension_semantics = [#tpu.dimension_semantics<parallel>], iteration_bounds = array<i64: 1>, scalar_prefetch = 0 : i64, scratch_operands = 0 : i64, tpu.core_type = #tpu.core_type<tc>, window_params = [{transform_indices = @transform_0, window_bounds = array<i64: 1, 2048>}, {transform_indices = @transform_1, window_bounds = array<i64: 1, 2048>}]} {
    %c0 = arith.constant 0 : index
    %c0_0 = arith.constant 0 : index
    %0 = vector.load %arg1[%c0, %c0_0] : memref<1x2048xf32, #tpu.memory_space<vmem>>, vector<1x2048xf32>
    %cst = arith.constant 2.500000e+01 : f32
    %1 = vector.broadcast %cst : f32 to vector<1x2048xf32>
    %2 = arith.mulf %1, %0 : vector<1x2048xf32>
    %cst_1 = arith.constant 1.250000e+01 : f32
    %3 = vector.broadcast %cst_1 : f32 to vector<1x2048xf32>
    %4 = arith.subf %2, %3 : vector<1x2048xf32>
    %5 = math.tanh %4 : vector<1x2048xf32>
    %cst_2 = arith.constant 1.000000e+00 : f32
    %6 = vector.broadcast %cst_2 : f32 to vector<1x2048xf32>
    %7 = arith.addf %6, %5 : vector<1x2048xf32>
    %cst_3 = arith.constant 5.000000e-01 : f32
    %8 = vector.broadcast %cst_3 : f32 to vector<1x2048xf32>
    %9 = arith.mulf %8, %7 : vector<1x2048xf32>
    %c0_4 = arith.constant 0 : index
    %c0_5 = arith.constant 0 : index
    %10 = vector.load %arg2[%c0_4, %c0_5] : memref<1x2048xf32, #tpu.memory_space<vmem>>, vector<1x2048xf32>
    tpu.vector_store %arg2[%c0_4, %c0_5], %9 {strides = array<i32>} : memref<1x2048xf32, #tpu.memory_space<vmem>>, vector<1x2048xf32>,
    return
  }
  func.func @transform_0(%arg0: i32) -> (i32, i32) {
    %c0_i32 = arith.constant 0 : i32
    %c0_i32_0 = arith.constant 0 : i32
    return %arg0, %c0_i32 : i32, i32
  }
  func.func @transform_1(%arg0: i32) -> (i32, i32) {
    %c0_i32 = arith.constant 0 : i32
    %c0_i32_0 = arith.constant 0 : i32
    return %arg0, %c0_i32 : i32, i32
  }
}

</mosaic_0001>

<llo_original>
// kernel: tpu_custom_call.1
$region0: #{tpu_custom_call.1}
  #allocation0 [shape = 'u32[]', space=smem, size = 0x4, offset = 0x4, fixed_abs, tag = 'smem constant byte address 0x4 - core index']
  #allocation1 [shape = 'u32[144,128]{1,0:T(1,128)}', space=vmem, size = 0x12000, scoped, tag = 'internal scratch']
  %s0 = inlined_call_operand.hbm [shape: f32[1,2048], index: 0, kind: input, shape index: {}]
  %s1 = inlined_call_operand.hbm [shape: f32[1,2048], index: 1, kind: output, shape index: {}]
  %s2 = sld [smem:[#allocation0]]
  $region18: #{tpu_custom_call.1} parent=0
    _
  %s4 = ssub.s32 1, %s2
  %s5 = scalar_select 0, %s4, %s2
  $region1: #{tpu_custom_call.1} parent=0
    #allocation2 [shape = 'u8[8192]{0}', space=vmem, size = 0x2000, scoped, tag = 'input window, operand 0, single buffered']
    #allocation3 [shape = 's32[1]{0}', space=sflag, size = 0x4, scoped, tag = 'scoped memory for tpu_custom_call.1']
    #allocation4 [shape = 's32[1]{0}', space=sflag, size = 0x4, scoped, tag = 'scoped memory for tpu_custom_call.1']
    #allocation5 [shape = 'u8[8192]{0}', space=vmem, size = 0x2000, scoped, tag = 'output window, operand 0, single buffered']
    %6 = vsyncpa [#allocation3], 0
    %7 = vsyncpa [#allocation4], 0
    // Predicated region
    $region2: #{tpu_custom_call.1} parent=1 // pred_check
      _
    $region3: #{tpu_custom_call.1} parent=1 // pred_check_branch
      %9 = sbr.rel (0) target = $region5
    $region4: #{tpu_custom_call.1} parent=1 // pred_region
      %s11 = ssub.s32 256, 256
      %12 = vsyncadd [#allocation3], %s11
      %s14 = sshll.u32 [#allocation2], 4
      %s15 = int_to_ptr.vmem [resolvable:$true] %s14
      %17 = dma.hbm_to_vmem [thread:$0]  %s0, 256, %s15, [#allocation3]
    $region5: #{tpu_custom_call.1} parent=1 // pred_fallthru
      _
    // Predicated region
    $region6: #{tpu_custom_call.1} parent=1 // pred_check
      _
    $region7: #{tpu_custom_call.1} parent=1 // pred_check_branch
      %19 = sbr.rel (0) target = $region9
    $region8: #{tpu_custom_call.1} parent=1 // pred_region
      %20 = dma.done [#allocation3], 256
    $region9: #{tpu_custom_call.1} parent=1 // pred_fallthru
      _
    %v21 = vld [vmem:[#allocation2] sm:$0xff]
    %v22 = vld [vmem:[#allocation2 + $0x8] sm:$0xff]
    %v23 = vmul.f32 %v21, 25.0
    %v24 = vmul.f32 %v22, 25.0
    %v25 = vsub.f32 %v23, 12.5
    %v26 = vsub.f32 %v24, 12.5
    %v27 = vtanh.pop %v25
    %v28 = vtanh.pop %v26
    %v29 = vadd.f32 %v27, 1.0
    %v30 = vadd.f32 %v28, 1.0
    %v31 = vmul.f32 %v29, 0.5
    %v32 = vmul.f32 %v30, 0.5
    %33 = vst [vmem:[#allocation5] sm:$0xff] %v31
    %34 = vst [vmem:[#allocation5 + $0x8] sm:$0xff] %v32
    // Predicated region
    $region10: #{tpu_custom_call.1} parent=1 // pred_check
      _
    $region11: #{tpu_custom_call.1} parent=1 // pred_check_branch
      %36 = sbr.rel (0) target = $region13
    $region12: #{tpu_custom_call.1} parent=1 // pred_region
      %s38 = ssub.s32 256, 256
      %39 = vsyncadd [#allocation4], %s38
      %s41 = sshll.u32 [#allocation5], 4
      %s42 = int_to_ptr.vmem [resolvable:$true] %s41
      %44 = dma.vmem_to_hbm [thread:$0]  %s42, 256, %s1, [#allocation4]
    $region13: #{tpu_custom_call.1} parent=1 // pred_fallthru
      _
    // Predicated region
    $region14: #{tpu_custom_call.1} parent=1 // pred_check
      _
    $region15: #{tpu_custom_call.1} parent=1 // pred_check_branch
      %46 = sbr.rel (0) target = $region17
    $region16: #{tpu_custom_call.1} parent=1 // pred_region
      %47 = dma.done [#allocation4], 256
    $region17: #{tpu_custom_call.1} parent=1 // pred_fallthru
      _
    %48 = vsyncpa [#allocation3], 1
    %49 = vsyncpa [#allocation4], 1

</llo_original>
